<compile_context>
chip_gen: v5e
topology: v5e:2x2
jax: 0.10.0
libtpu: 0.0.40
codegen_flags: <defaults>
</compile_context>

<pallas_src>
import functools

import jax
import jax.numpy as jnp
from jax.experimental import pallas as pl
from jax.experimental.pallas import tpu as pltpu


def _mean_pool_kernel(h_ref, m_ref, o_ref, msum_ref, *, seq_len, seq_tile, has_tail):
    """One grid step over a (Bt, St, Ht) hidden tile.

    h_ref:    (Bt, St, Ht)  hidden-state tile (input dtype)
    m_ref:    (Bt, 1,  St)  attention-mask tile (input dtype, zero-padded past seq_len)
    o_ref:    (Bt, 1,  Ht)  f32 output block; resident across the seq grid axis and
                            used directly as the accumulator
    msum_ref: (Bt, 1,  1)   f32 running mask sum
    """
    si = pl.program_id(2)

    @pl.when(si == 0)
    def _():
        o_ref[...] = jnp.zeros_like(o_ref)
        msum_ref[...] = jnp.zeros_like(msum_ref)

    m = m_ref[...]                                   # (Bt, 1, St)
    h = h_ref[...]                                   # (Bt, St, Ht)

    if has_tail:
        # The last sequence block is partial: h past seq_len is undefined (the padded
        # mask there is a clean 0, but 0 * garbage could be NaN), so zero the tail.
        pos = si * seq_tile + jax.lax.broadcasted_iota(jnp.int32, (1, seq_tile, 1), 1)
        h = jnp.where(pos < seq_len, h, jnp.zeros_like(h))

    # Masked sum over the sequence axis on the MXU (batched mat-vec, f32 accumulate).
    o_ref[...] += jnp.einsum("bqs,bsh->bqh", m, h, preferred_element_type=jnp.float32)
    # Mask sum is tiny; a plain VPU/XLU reduction in f32 is exact for 0/1 values.
    msum_ref[...] += jnp.sum(m.astype(jnp.float32), axis=2, keepdims=True)

    @pl.when(si == pl.num_programs(2) - 1)
    def _():
        inv = pl.reciprocal(jnp.maximum(msum_ref[...], 1e-9), approx=False)
        o_ref[...] = o_ref[...] * inv


def _vmem_budget():
    """Generation-aware (scoped VMEM limit, per-hidden-block byte cap)."""
    try:
        cap = pltpu.get_tpu_info().vmem_capacity_bytes
    except Exception:
        cap = 64 * 1024 * 1024  # conservative fallback: v7x per-TC VMEM
    # ~3/4 of physical as the scoped limit (96 MiB on v5e/v6e, 48 MiB on v7x); the
    # hidden-state block gets ~1/3 of that (double-buffered h + mask/out/scratch).
    limit = min((cap * 3) // 4, 96 * 1024 * 1024)
    return limit, limit // 3


def mean_pooling(last_hidden_state: jax.Array, attention_mask: jax.Array,
                 *, block_cap_bytes: int | None = None) -> jax.Array:
    """Masked mean pooling over the sequence axis. Returns (B, H) float32."""
    B, S, H = last_hidden_state.shape
    assert attention_mask.shape == (B, S)

    h_dtype = last_hidden_state.dtype
    itemsize = jnp.dtype(h_dtype).itemsize
    m_dtype = h_dtype if jnp.issubdtype(h_dtype, jnp.floating) else jnp.float32

    vmem_limit, auto_cap = _vmem_budget()
    block_cap = auto_cap if block_cap_bytes is None else block_cap_bytes

    # ---- tile selection ----------------------------------------------------
    Bt = min(B, 8)                         # batch rows per step
    n_b = -(-B // Bt)                      # cdiv; partial last batch block is fine

    # Hidden-dim tiling (lane tiles, multiples of 128).
    n_h = 1
    if n_b < 2 and H % 256 == 0:
        n_h = 2                            # single batch block: feed both v7x TCs
    while (H % (2 * n_h) == 0 and (H // (2 * n_h)) % 128 == 0
           and Bt * min(S, 128) * (H // n_h) * itemsize > block_cap):
        n_h *= 2                           # very large H: shrink lane tile, not Bt
    Ht = H // n_h

    # Sequence tile: largest that keeps one hidden block under the cap; multiple of
    # 128 (covers f32/bf16/int8 sublane packing) unless the whole sequence fits.
    max_st = block_cap // max(1, Bt * Ht * itemsize)
    if max_st >= S:
        St = S
    else:
        St = max(128, (max_st // 128) * 128)
    n_s = -(-S // St)
    S_pad = n_s * St
    has_tail = (S % St) != 0

    # Mask as (B, 1, S_pad): S lane-dense next to the MXU contraction, 0/1 values are
    # exact in the hidden dtype, zero-padding past S contributes nothing to either sum.
    mask = attention_mask.astype(m_dtype).reshape(B, 1, S)
    if S_pad != S:
        mask = jnp.pad(mask, ((0, 0), (0, 0), (0, S_pad - S)))

    kernel = functools.partial(_mean_pool_kernel,
                               seq_len=S, seq_tile=St, has_tail=has_tail)

    out = pl.pallas_call(
        kernel,
        out_shape=jax.ShapeDtypeStruct((B, 1, H), jnp.float32),
        grid_spec=pltpu.PrefetchScalarGridSpec(
            num_scalar_prefetch=0,
            grid=(n_b, n_h, n_s),
            in_specs=[
                pl.BlockSpec((Bt, St, Ht), lambda bi, hi, si: (bi, si, hi)),
                pl.BlockSpec((Bt, 1, St), lambda bi, hi, si: (bi, 0, si)),
            ],
            out_specs=pl.BlockSpec((Bt, 1, Ht), lambda bi, hi, si: (bi, 0, hi)),
            scratch_shapes=[pltpu.VMEM((Bt, 1, 1), jnp.float32)],
        ),
        compiler_params=pltpu.CompilerParams(
            # batch & hidden axes independent (megacore), sequence axis is a reduction
            dimension_semantics=("parallel", "parallel", "arbitrary"),
            vmem_limit_bytes=vmem_limit,
        ),
    )(last_hidden_state, mask)
    return out.reshape(B, H)


def mean_pooling_ref(last_hidden_state, attention_mask):
    # Pure-JAX reference mirroring the PyTorch forward.
    m = attention_mask[:, :, None].astype(jnp.float32)
    sum_emb = jnp.sum(last_hidden_state.astype(jnp.float32) * m, axis=1)
    sum_mask = jnp.maximum(jnp.sum(m, axis=1), 1e-9)
    return sum_emb / sum_mask


if __name__ == "__main__":
    key = jax.random.PRNGKey(0)
    k_h, k_m = jax.random.split(key)

    # Small primary test (matches the module's expected layout).
    B, S, H = 2, 8, 32
    last_hidden_state = jax.random.normal(k_h, (B, S, H), dtype=jnp.float32)
    attention_mask = (jax.random.uniform(k_m, (B, S)) > 0.3).astype(jnp.int32)

    out = jax.block_until_ready(mean_pooling(last_hidden_state, attention_mask))
    ref = mean_pooling_ref(last_hidden_state, attention_mask)
    assert out.shape == (B, H)
    assert jnp.allclose(out, ref, atol=1e-5, rtol=1e-5), "mismatch vs reference"

    # Exercise the tiled path (sequence tiling + partial tail + hidden split) by
    # forcing a tiny per-block cap; data stays small.
    k_h2, k_m2 = jax.random.split(jax.random.PRNGKey(1))
    B2, S2, H2 = 2, 300, 256
    hs2 = jax.random.normal(k_h2, (B2, S2, H2), dtype=jnp.float32)
    mask2 = (jax.random.uniform(k_m2, (B2, S2)) > 0.5).astype(jnp.int32)
    out2 = jax.block_until_ready(mean_pooling(hs2, mask2, block_cap_bytes=64 * 1024))
    ref2 = mean_pooling_ref(hs2, mask2)
    assert jnp.allclose(out2, ref2, atol=1e-4, rtol=1e-4), "mismatch vs reference (tiled)"

    print("KERNEL_OK")
</pallas_src>

<mosaic_0001>
module attributes {stable_mosaic.version = 11 : i64} {
  func.func @_mean_pool_kernel(%arg0: i32, %arg1: i32, %arg2: i32, %arg3: memref<2x8x32xf32, #tpu.memory_space<vmem>>, %arg4: memref<2x1x8xf32, #tpu.memory_space<vmem>>, %arg5: memref<2x1x32xf32, #tpu.memory_space<vmem>>, %arg6: memref<2x1x1xf32, #tpu.memory_space<vmem>>) attributes {dimension_semantics = [#tpu.dimension_semantics<parallel>, #tpu.dimension_semantics<parallel>, #tpu.dimension_semantics<arbitrary>], iteration_bounds = array<i64: 1, 1, 1>, scalar_prefetch = 0 : i64, scratch_operands = 1 : i64, tpu.core_type = #tpu.core_type<tc>, window_params = [{transform_indices = @transform_0, window_bounds = array<i64: 2, 8, 32>}, {transform_indices = @transform_1, window_bounds = array<i64: 2, 1, 8>}, {transform_indices = @transform_2, window_bounds = array<i64: 2, 1, 32>}]} {
    %c0_i32 = arith.constant 0 : i32
    %0 = arith.cmpi eq, %arg2, %c0_i32 : i32
    %1 = arith.extui %0 : i1 to i32
    %c0_i32_0 = arith.constant 0 : i32
    %2 = arith.cmpi ne, %1, %c0_i32_0 : i32
    scf.if %2 {
      %cst_21 = arith.constant 0.000000e+00 : f32
      %17 = vector.broadcast %cst_21 : f32 to vector<2x1x32xf32>
      %c0_22 = arith.constant 0 : index
      %c0_23 = arith.constant 0 : index
      %c0_24 = arith.constant 0 : index
      %18 = vector.load %arg5[%c0_22, %c0_23, %c0_24] : memref<2x1x32xf32, #tpu.memory_space<vmem>>, vector<2x1x32xf32>
      tpu.vector_store %arg5[%c0_22, %c0_23, %c0_24], %17 {strides = array<i32>} : memref<2x1x32xf32, #tpu.memory_space<vmem>>, vector<2x1x32xf32>,
      %cst_25 = arith.constant 0.000000e+00 : f32
      %19 = vector.broadcast %cst_25 : f32 to vector<2x1x1xf32>
      %c0_26 = arith.constant 0 : index
      %c0_27 = arith.constant 0 : index
      %c0_28 = arith.constant 0 : index
      %20 = vector.load %arg6[%c0_26, %c0_27, %c0_28] : memref<2x1x1xf32, #tpu.memory_space<vmem>>, vector<2x1x1xf32>
      tpu.vector_store %arg6[%c0_26, %c0_27, %c0_28], %19 {strides = array<i32>} : memref<2x1x1xf32, #tpu.memory_space<vmem>>, vector<2x1x1xf32>,
    } else {
    }
    %c0 = arith.constant 0 : index
    %c0_1 = arith.constant 0 : index
    %c0_2 = arith.constant 0 : index
    %3 = vector.load %arg4[%c0, %c0_1, %c0_2] : memref<2x1x8xf32, #tpu.memory_space<vmem>>, vector<2x1x8xf32>
    %c0_3 = arith.constant 0 : index
    %c0_4 = arith.constant 0 : index
    %c0_5 = arith.constant 0 : index
    %4 = vector.load %arg3[%c0_3, %c0_4, %c0_5] : memref<2x8x32xf32, #tpu.memory_space<vmem>>, vector<2x8x32xf32>
    %c0_6 = arith.constant 0 : index
    %c0_7 = arith.constant 0 : index
    %c0_8 = arith.constant 0 : index
    %5 = vector.load %arg5[%c0_6, %c0_7, %c0_8] : memref<2x1x32xf32, #tpu.memory_space<vmem>>, vector<2x1x32xf32>
    "tpu.trace_start"() <{level = 10 : i32, message = "bqs,bsh->bqh"}> : () -> ()
    %cst = arith.constant dense<0.000000e+00> : vector<2x1x32xf32>
    %6 = tpu.matmul %3, %4, %cst {dimension_numbers = #tpu.dot_dimension_numbers<[2], [1], [1], [2], [0, 0, 0, 1, 1, 2], [0], [0]>} : vector<2x1x8xf32>, vector<2x8x32xf32>, vector<2x1x32xf32> -> vector<2x1x32xf32>
    "tpu.trace_stop"() : () -> ()
    %7 = arith.addf %5, %6 : vector<2x1x32xf32>
    %c0_9 = arith.constant 0 : index
    %c0_10 = arith.constant 0 : index
    %c0_11 = arith.constant 0 : index
    %8 = vector.load %arg5[%c0_9, %c0_10, %c0_11] : memref<2x1x32xf32, #tpu.memory_space<vmem>>, vector<2x1x32xf32>
    tpu.vector_store %arg5[%c0_9, %c0_10, %c0_11], %7 {strides = array<i32>} : memref<2x1x32xf32, #tpu.memory_space<vmem>>, vector<2x1x32xf32>,
    %c0_12 = arith.constant 0 : index
    %c0_13 = arith.constant 0 : index
    %c0_14 = arith.constant 0 : index
    %9 = vector.load %arg6[%c0_12, %c0_13, %c0_14] : memref<2x1x1xf32, #tpu.memory_space<vmem>>, vector<2x1x1xf32>
    %cst_15 = arith.constant dense<0.000000e+00> : vector<2x1xf32>
    %10 = vector.multi_reduction <add>, %3, %cst_15 [2] : vector<2x1x8xf32> to vector<2x1xf32>
    %11 = vector.shape_cast %10 : vector<2x1xf32> to vector<2x1x1xf32>
    %12 = arith.addf %9, %11 : vector<2x1x1xf32>
    %c0_16 = arith.constant 0 : index
    %c0_17 = arith.constant 0 : index
    %c0_18 = arith.constant 0 : index
    %13 = vector.load %arg6[%c0_16, %c0_17, %c0_18] : memref<2x1x1xf32, #tpu.memory_space<vmem>>, vector<2x1x1xf32>
    tpu.vector_store %arg6[%c0_16, %c0_17, %c0_18], %12 {strides = array<i32>} : memref<2x1x1xf32, #tpu.memory_space<vmem>>, vector<2x1x1xf32>,
    %c0_i32_19 = arith.constant 0 : i32
    %14 = arith.cmpi eq, %arg2, %c0_i32_19 : i32
    %15 = arith.extui %14 : i1 to i32
    %c0_i32_20 = arith.constant 0 : i32
    %16 = arith.cmpi ne, %15, %c0_i32_20 : i32
    scf.if %16 {
      %c0_21 = arith.constant 0 : index
      %c0_22 = arith.constant 0 : index
      %c0_23 = arith.constant 0 : index
      %17 = vector.load %arg6[%c0_21, %c0_22, %c0_23] : memref<2x1x1xf32, #tpu.memory_space<vmem>>, vector<2x1x1xf32>
      %cst_24 = arith.constant 9.99999971E-10 : f32
      %18 = vector.broadcast %cst_24 : f32 to vector<2x1x1xf32>
      %19 = arith.maximumf %17, %18 : vector<2x1x1xf32>
      %20 = tpu.reciprocal %19 : vector<2x1x1xf32> -> vector<2x1x1xf32>
      %c0_25 = arith.constant 0 : index
      %c0_26 = arith.constant 0 : index
      %c0_27 = arith.constant 0 : index
      %21 = vector.load %arg5[%c0_25, %c0_26, %c0_27] : memref<2x1x32xf32, #tpu.memory_space<vmem>>, vector<2x1x32xf32>
      %22 = vector.broadcast %20 : vector<2x1x1xf32> to vector<2x1x32xf32>
      %23 = arith.mulf %21, %22 : vector<2x1x32xf32>
      %c0_28 = arith.constant 0 : index
      %c0_29 = arith.constant 0 : index
      %c0_30 = arith.constant 0 : index
      %24 = vector.load %arg5[%c0_28, %c0_29, %c0_30] : memref<2x1x32xf32, #tpu.memory_space<vmem>>, vector<2x1x32xf32>
      tpu.vector_store %arg5[%c0_28, %c0_29, %c0_30], %23 {strides = array<i32>} : memref<2x1x32xf32, #tpu.memory_space<vmem>>, vector<2x1x32xf32>,
    } else {
    }
    return
  }
  func.func @transform_0(%arg0: i32, %arg1: i32, %arg2: i32) -> (i32, i32, i32) {
    %c0_i32 = arith.constant 0 : i32
    return %arg0, %arg2, %arg1 : i32, i32, i32
  }
  func.func @transform_1(%arg0: i32, %arg1: i32, %arg2: i32) -> (i32, i32, i32) {
    %c0_i32 = arith.constant 0 : i32
    %c0_i32_0 = arith.constant 0 : i32
    return %arg0, %c0_i32, %arg2 : i32, i32, i32
  }
  func.func @transform_2(%arg0: i32, %arg1: i32, %arg2: i32) -> (i32, i32, i32) {
    %c0_i32 = arith.constant 0 : i32
    %c0_i32_0 = arith.constant 0 : i32
    return %arg0, %c0_i32, %arg1 : i32, i32, i32
  }
}

</mosaic_0001>

<llo_original>
// kernel: tpu_custom_call.1
$region0: #{tpu_custom_call.1}
  #allocation0 [shape = 'u32[]', space=smem, size = 0x4, offset = 0x4, fixed_abs, tag = 'smem constant byte address 0x4 - core index']
  #allocation1 [shape = 'u32[72,128]{1,0:T(1,128)}', space=vmem, size = 0x9000, scoped, tag = 'internal scratch']
  #allocation2 [shape = 'f32[2,1,1]{2,1,0:T(1,128)}', space=vmem, size = 0x400, scoped, tag = 'scratch operand']
  %s0 = inlined_call_operand.hbm [shape: f32[2,8,32], index: 0, kind: input, shape index: {}]
  %s1 = inlined_call_operand.hbm [shape: f32[2,1,8], index: 1, kind: input, shape index: {}]
  %s2 = inlined_call_operand.hbm [shape: f32[2,1,32], index: 2, kind: output, shape index: {}]
  %s3 = sld [smem:[#allocation0]]
  $region34: #{tpu_custom_call.1} parent=0
    _
  %s5 = ssub.s32 1, %s3
  %s6 = scalar_select 0, %s5, %s3
  $region1: #{tpu_custom_call.1} parent=0
    #allocation3 [shape = 'u8[8192]{0}', space=vmem, size = 0x2000, scoped, tag = 'input window, operand 0, single buffered']
    #allocation4 [shape = 's32[1]{0}', space=sflag, size = 0x4, scoped, tag = 'scoped memory for tpu_custom_call.1']
    #allocation5 [shape = 's32[1]{0}', space=sflag, size = 0x4, scoped, tag = 'scoped memory for tpu_custom_call.1']
    #allocation6 [shape = 'u8[1024]{0}', space=vmem, size = 0x400, scoped, tag = 'input window, operand 1, single buffered']
    #allocation7 [shape = 's32[1]{0}', space=sflag, size = 0x4, scoped, tag = 'scoped memory for tpu_custom_call.1']
    #allocation8 [shape = 'u8[1024]{0}', space=vmem, size = 0x400, scoped, tag = 'output window, operand 0, single buffered']
    %7 = vsyncpa [#allocation4], 0
    %8 = vsyncpa [#allocation7], 0
    %9 = vsyncpa [#allocation5], 0
    // Predicated region
    $region2: #{tpu_custom_call.1} parent=1 // pred_check
      _
    $region3: #{tpu_custom_call.1} parent=1 // pred_check_branch
      %11 = sbr.rel (0) target = $region5
    $region4: #{tpu_custom_call.1} parent=1 // pred_region
      %13 = vsyncadd [#allocation4], 0
      %s14 = sshll.u32 %s0, 4
      %s15 = int_to_ptr.hbm [resolvable:$true] %s14
      %s16 = sshll.u32 [#allocation3], 4
      %s17 = int_to_ptr.vmem [resolvable:$true] %s16
      %22 = dma.hbm_to_vmem [thread:$0]  %s15, 256, %s17, [#allocation4], 128, 128, 8
    $region5: #{tpu_custom_call.1} parent=1 // pred_fallthru
      _
    // Predicated region
    $region6: #{tpu_custom_call.1} parent=1 // pred_check
      _
    $region7: #{tpu_custom_call.1} parent=1 // pred_check_branch
      %24 = sbr.rel (0) target = $region9
    $region8: #{tpu_custom_call.1} parent=1 // pred_region
      %26 = vsyncadd [#allocation7], 0
      %s27 = sshll.u32 %s1, 4
      %s28 = int_to_ptr.hbm [resolvable:$true] %s27
      %s29 = sshll.u32 [#allocation6], 4
      %s30 = int_to_ptr.vmem [resolvable:$true] %s29
      %35 = dma.hbm_to_vmem [thread:$0]  %s28, 32, %s30, [#allocation7], 16, 16, 1
    $region9: #{tpu_custom_call.1} parent=1 // pred_fallthru
      _
    // Predicated region
    $region10: #{tpu_custom_call.1} parent=1 // pred_check
      _
    $region11: #{tpu_custom_call.1} parent=1 // pred_check_branch
      %37 = sbr.rel (0) target = $region13
    $region12: #{tpu_custom_call.1} parent=1 // pred_region
      %39 = dma.done [#allocation4], 256
    $region13: #{tpu_custom_call.1} parent=1 // pred_fallthru
      _
    // Predicated region
    $region14: #{tpu_custom_call.1} parent=1 // pred_check
      _
    $region15: #{tpu_custom_call.1} parent=1 // pred_check_branch
      %41 = sbr.rel (0) target = $region17
    $region16: #{tpu_custom_call.1} parent=1 // pred_region
      %43 = dma.done [#allocation7], 32
    $region17: #{tpu_custom_call.1} parent=1 // pred_fallthru
      _
    %p44 = scmp.eq.s32.totalorder 0, 0
    // Predicated region
    $region18: #{tpu_custom_call.1} parent=1 // pred_check
      %p45 = pneg %p44
    $region19: #{tpu_custom_call.1} parent=1 // pred_check_branch
      %47 = sbr.rel (%p45) target = $region21
    $region20: #{tpu_custom_call.1} parent=1 // pred_region
      %vm48 = vcmask 253952
      %49 = vst.msk [vmem:[#allocation8] sm:$0x1] %vm48, 0.0
      %50 = vst.msk [vmem:[#allocation8 + $0x1] sm:$0x1] %vm48, 0.0
      %vm51 = vcmask 0
      %52 = vst.msk [vmem:[#allocation2] sm:$0x1] %vm51, 0.0
      %53 = vst.msk [vmem:[#allocation2 + $0x1] sm:$0x1] %vm51, 0.0
    $region21: #{tpu_custom_call.1} parent=1 // pred_fallthru
      _
    %v54 = vld [vmem:[#allocation6] sm:$0x1]
    %v55 = vld [vmem:[#allocation6 + $0x1] sm:$0x1]
    %v56 = vld [vmem:[#allocation3] sm:$0xff]
    %v57 = vld [vmem:[#allocation3 + $0x8] sm:$0xff]
    %v58 = vld [vmem:[#allocation8] sm:$0x1]
    %v59 = vld [vmem:[#allocation8 + $0x1] sm:$0x1]
    %vm60 = vcmask 64512
    %v62 = vsel %vm60, %v54, 0
    %64 = vmatpush.msra.mxu0 0.0
    %65 = vmatpush.msra.mxu0 0.0
    %66 = vmatpush.msra.mxu0 0.0
    %67 = vmatpush.msra.mxu0 0.0
    %68 = vmatpush.msra.mxu0 0.0
    %69 = vmatpush.msra.mxu0 0.0
    %70 = vmatpush.msra.mxu0 0.0
    %71 = vmatpush.msra.mxu0 0.0
    %72 = vmatpush.msra.mxu0 0.0
    %73 = vmatpush.msra.mxu0 0.0
    %74 = vmatpush.msra.mxu0 0.0
    %75 = vmatpush.msra.mxu0 0.0
    %76 = vmatpush.msra.mxu0 0.0
    %77 = vmatpush.msra.mxu0 0.0
    %78 = vmatpush.msra.mxu0 0.0
    %79 = vmatpush.msra.mxu0 %v56
    %80 = vmatmul.f32.gmra.mxu0 %v62
    %v81 = vpop.f32.mrf.mxu0
    %v82 = vadd.f32 0.0, %v81
    %83 = vdwg.mxu0
    %v85 = vsel %vm60, %v55, 0
    %87 = vmatpush.msra.mxu0 0.0
    %88 = vmatpush.msra.mxu0 0.0
    %89 = vmatpush.msra.mxu0 0.0
    %90 = vmatpush.msra.mxu0 0.0
    %91 = vmatpush.msra.mxu0 0.0
    %92 = vmatpush.msra.mxu0 0.0
    %93 = vmatpush.msra.mxu0 0.0
    %94 = vmatpush.msra.mxu0 0.0
    %95 = vmatpush.msra.mxu0 0.0
    %96 = vmatpush.msra.mxu0 0.0
    %97 = vmatpush.msra.mxu0 0.0
    %98 = vmatpush.msra.mxu0 0.0
    %99 = vmatpush.msra.mxu0 0.0
    %100 = vmatpush.msra.mxu0 0.0
    %101 = vmatpush.msra.mxu0 0.0
    %102 = vmatpush.msra.mxu0 %v57
    %103 = vmatmul.f32.gmra.mxu0 %v85
    %v104 = vpop.f32.mrf.mxu0
    %v105 = vadd.f32 0.0, %v104
    %106 = vdwg.mxu0
    %v107 = vadd.f32 %v58, %v82
    %v108 = vadd.f32 %v59, %v105
    %vm109 = vcmask 253952
    %110 = vst.msk [vmem:[#allocation8] sm:$0x1] %vm109, %v107
    %111 = vst.msk [vmem:[#allocation8 + $0x1] sm:$0x1] %vm109, %v108
    %v112 = vld [vmem:[#allocation2] sm:$0x1]
    %v113 = vld [vmem:[#allocation2 + $0x1] sm:$0x1]
    %vm114 = vcmask 57344
    %v115 = vsel %vm114, %v54, 0.0
    %116 = vadd.xlane.f32.xlu0 %v115
    %v117 = vpop.xlane.xlu0 %116
    %v118 = vsel %vm114, %v55, 0.0
    %119 = vadd.xlane.f32.xlu0 %v118
    %v120 = vpop.xlane.xlu0 %119
    %v121 = vadd.f32 %v112, %v117
    %v122 = vadd.f32 %v113, %v120
    %vm123 = vcmask 0
    %124 = vst.msk [vmem:[#allocation2] sm:$0x1] %vm123, %v121
    %125 = vst.msk [vmem:[#allocation2 + $0x1] sm:$0x1] %vm123, %v122
    // Predicated region
    $region22: #{tpu_custom_call.1} parent=1 // pred_check
      %p126 = pneg %p44
    $region23: #{tpu_custom_call.1} parent=1 // pred_check_branch
      %128 = sbr.rel (%p126) target = $region25
    $region24: #{tpu_custom_call.1} parent=1 // pred_region
      %v129 = vld [vmem:[#allocation2] sm:$0x1]
      %v130 = vld [vmem:[#allocation2 + $0x1] sm:$0x1]
      %v131 = vmax.f32 %v129, 1e-09
      %v132 = vmax.f32 %v130, 1e-09
      %v133 = vrcp.pop %v131
      %v134 = vmul.f32 %v131, %v133
      %v135 = vsub.f32 1.0, %v134
      %v136 = vmul.f32 %v133, %v135
      %v137 = vadd.f32 %v133, %v136
      %vm138 = vweird.f32 %v131
      %vm139 = vweird.f32 %v133
      %vm140 = vmor %vm138, %vm139
      %v141 = vsel %vm140, %v133, %v137
      %v142 = vand.u32 2147483647, %v131
      %vm143 = vcmp.eq.f32.partialorder %v142, 8.507059e+37
      %v144 = vand.u32 %v131, 2147483648
      %v145 = vor.u32 1.1754944e-38, %v144
      %v146 = vsel %vm143, %v145, %v141
      %v147 = vrcp.pop %v132
      %v148 = vmul.f32 %v132, %v147
      %v149 = vsub.f32 1.0, %v148
      %v150 = vmul.f32 %v147, %v149
      %v151 = vadd.f32 %v147, %v150
      %vm152 = vweird.f32 %v132
      %vm153 = vweird.f32 %v147
      %vm154 = vmor %vm152, %vm153
      %v155 = vsel %vm154, %v147, %v151
      %v156 = vand.u32 2147483647, %v132
      %vm157 = vcmp.eq.f32.partialorder %v156, 8.507059e+37
      %v158 = vand.u32 %v132, 2147483648
      %v159 = vor.u32 1.1754944e-38, %v158
      %v160 = vsel %vm157, %v159, %v155
      %v161 = vld [vmem:[#allocation8] sm:$0x1]
      %v162 = vld [vmem:[#allocation8 + $0x1] sm:$0x1]
      %164 = vset.pattern.permute.xlu0 0
      %165 = vperm.xlu0 %164, %v146
      %v166 = vpop.permute.xlu0 %165
      %v168 = vperm.slane %v166, 0
      %170 = vset.pattern.permute.xlu0 0
      %171 = vperm.xlu0 %170, %v160
      %v172 = vpop.permute.xlu0 %171
      %v174 = vperm.slane %v172, 0
      %v175 = vmul.f32 %v161, %v168
      %v176 = vmul.f32 %v162, %v174
      %177 = vst.msk [vmem:[#allocation8] sm:$0x1] %vm109, %v175
      %178 = vst.msk [vmem:[#allocation8 + $0x1] sm:$0x1] %vm109, %v176
    $region25: #{tpu_custom_call.1} parent=1 // pred_fallthru
      _
    // Predicated region
    $region26: #{tpu_custom_call.1} parent=1 // pred_check
      _
    $region27: #{tpu_custom_call.1} parent=1 // pred_check_branch
      %180 = sbr.rel (0) target = $region29
    $region28: #{tpu_custom_call.1} parent=1 // pred_region
      %182 = vsyncadd [#allocation5], 0
      %s183 = sshll.u32 [#allocation8], 4
      %s184 = int_to_ptr.vmem [resolvable:$true] %s183
      %s185 = sshll.u32 %s2, 4
      %s186 = int_to_ptr.hbm [resolvable:$true] %s185
      %191 = dma.vmem_to_hbm [thread:$0]  %s184, 32, %s186, [#allocation5], 16, 16, 1
    $region29: #{tpu_custom_call.1} parent=1 // pred_fallthru
      _
    // Predicated region
    $region30: #{tpu_custom_call.1} parent=1 // pred_check
      _
    $region31: #{tpu_custom_call.1} parent=1 // pred_check_branch
      %193 = sbr.rel (0) target = $region33
    $region32: #{tpu_custom_call.1} parent=1 // pred_region
      %195 = dma.done [#allocation5], 32
    $region33: #{tpu_custom_call.1} parent=1 // pred_fallthru
      _
    %196 = vsyncpa [#allocation4], 1
    %197 = vsyncpa [#allocation7], 1
    %198 = vsyncpa [#allocation5], 1

</llo_original>
